<compile_context>
chip_gen: v6e
topology: v6e:2x2x1
jax: 0.10.0
libtpu: 0.0.40
codegen_flags: <defaults>
</compile_context>

<pallas_src>
import numpy as np
import jax
import jax.numpy as jnp
from jax.experimental import pallas as pl
from jax.experimental.pallas import tpu as pltpu


def softmax_gate_kernel(x_ref, w_ref, b_ref, out_ref):
    # x_ref: (Tm, C)   w_ref: (C, E)   b_ref: (1, E)   out_ref: (Tm, E)
    scores = jnp.dot(x_ref[...], w_ref[...],
                     preferred_element_type=jnp.float32) + b_ref[...]
    m = jnp.max(scores, axis=-1, keepdims=True)        # XLU cross-lane max
    e = jnp.exp(scores - m)                             # EUP
    denom = jnp.sum(e, axis=-1, keepdims=True)          # XLU cross-lane sum
    inv = pl.reciprocal(denom, approx=True)              # EUP (free slot)
    out_ref[...] = (e * inv).astype(out_ref.dtype)


def _round_up(n, m):
    return ((n + m - 1) // m) * m


def _round_down(n, m):
    return (n // m) * m


def _choose_tile_rows(M, C, E, x_bytes, out_bytes, *, cap=1024,
                      pipeline_budget=20 * 1024 * 1024):
    """Largest row tile (multiple of 8 sublanes) whose double-buffered x + out
    footprint fits `pipeline_budget`, capped at `cap` and clamped to M.
    If that would leave only one grid step, split so n_blk >= 2 (keeps both
    TensorCores busy on v7x; harmless elsewhere)."""
    per_row = 2 * (C * x_bytes + E * out_bytes)        # double-buffered in + out
    tm = max(8, _round_down(pipeline_budget // max(per_row, 1), 8))
    tm = min(tm, cap, _round_up(M, 8))
    tm = max(8, _round_down(tm, 8))
    if M > 8 and pl.cdiv(M, tm) < 2:
        tm = _round_up(pl.cdiv(M, 2), 8)
    return tm


def softmax_gate_forward(x, weight_t, bias, *, block_rows=1024,
                         out_dtype=jnp.float32):
    """x: (..., c_in) in its native dtype (bf16/f32); weight_t: (c_in, n_exp)
    (transpose of the PyTorch nn.Linear weight); bias: (n_exp,) or (1, n_exp).
    Returns softmax(x @ weight_t + bias, axis=-1) in `out_dtype`."""
    orig_lead = x.shape[:-1]
    C = x.shape[-1]
    E = weight_t.shape[-1]
    M = int(np.prod(orig_lead)) if orig_lead else 1

    x2 = x.reshape(M, C)                               # no cast, no pad
    if weight_t.dtype != x2.dtype:
        weight_t = weight_t.astype(x2.dtype)           # MXU-native operand pair
    bias = bias.reshape(1, E).astype(jnp.float32)      # added to f32 accumulator

    x_bytes = x2.dtype.itemsize
    w_bytes = weight_t.dtype.itemsize
    out_bytes = np.dtype(out_dtype).itemsize

    tm = _choose_tile_rows(M, C, E, x_bytes, out_bytes, cap=block_rows)
    n_blk = pl.cdiv(M, tm)

    # Explicit VMEM limit: actual footprint + headroom, >= 32 MiB so v5e's
    # 16 MiB default scoped limit does not throttle pipelining, <= 48 MiB so it
    # stays inside v7x's 64 MiB physical VMEM.
    footprint = (2 * tm * C * x_bytes + 2 * tm * E * out_bytes
                 + C * E * w_bytes + _round_up(E, 128) * 4)
    vmem_limit = int(min(max(footprint + (8 << 20), 32 << 20), 48 << 20))

    cost = pl.CostEstimate(
        flops=2 * M * C * E + 6 * M * E,
        transcendentals=M * E + M,
        bytes_accessed=(M * C * x_bytes + C * E * w_bytes + E * 4
                        + M * E * out_bytes),
    )

    out = pl.pallas_call(
        softmax_gate_kernel,
        out_shape=jax.ShapeDtypeStruct((M, E), out_dtype),
        grid_spec=pltpu.PrefetchScalarGridSpec(
            num_scalar_prefetch=0,
            grid=(n_blk,),
            in_specs=[
                pl.BlockSpec((tm, C), lambda i: (i, 0)),
                # Grid-invariant weight/bias: single-buffered, DMA'd once.
                pl.BlockSpec((C, E), lambda i: (0, 0),
                             pipeline_mode=pl.Buffered(1)),
                pl.BlockSpec((1, E), lambda i: (0, 0),
                             pipeline_mode=pl.Buffered(1)),
            ],
            out_specs=pl.BlockSpec((tm, E), lambda i: (i, 0)),
        ),
        compiler_params=pltpu.CompilerParams(
            dimension_semantics=("parallel",),
            vmem_limit_bytes=vmem_limit,
        ),
        cost_estimate=cost,
    )(x2, weight_t, bias)

    return out.reshape(orig_lead + (E,))


if __name__ == "__main__":
    # Small shapes consistent with the module: x is [batch, seq, c_in].
    B, S, C_IN, N_EXP = 2, 8, 32, 4

    key = jax.random.PRNGKey(0)
    kx, kw, kb = jax.random.split(key, 3)

    # Typical activation dtype: bf16, fed straight to the MXU (no wrapper cast).
    x = jax.random.normal(kx, (B, S, C_IN), jnp.float32).astype(jnp.bfloat16)

    # PyTorch nn.Linear default init: U(-1/sqrt(c_in), 1/sqrt(c_in)).
    bound = 1.0 / np.sqrt(C_IN)
    # Stored pre-transposed: (c_in, n_exp) == W^T of the PyTorch (n_exp, c_in) weight.
    weight_t = jax.random.uniform(kw, (C_IN, N_EXP), jnp.float32,
                                  -bound, bound).astype(jnp.bfloat16)
    bias = jax.random.uniform(kb, (N_EXP,), jnp.float32, -bound, bound)

    out = softmax_gate_forward(x, weight_t, bias)
    out = jax.block_until_ready(out)

    # Reference in f32 on the same (bf16-valued) inputs.
    ref = jax.nn.softmax(
        x.astype(jnp.float32) @ weight_t.astype(jnp.float32) + bias, axis=-1)

    np.testing.assert_allclose(np.asarray(out), np.asarray(ref),
                               rtol=2e-3, atol=2e-3)
    # Rows of a softmax must sum to 1 (approx reciprocal => ~1e-4 tolerance).
    np.testing.assert_allclose(np.asarray(out).sum(-1), 1.0,
                               rtol=2e-3, atol=2e-3)

    print("KERNEL_OK")
</pallas_src>

<mosaic_0001>
module attributes {stable_mosaic.version = 11 : i64} {
  func.func @softmax_gate_kernel(%arg0: i32, %arg1: memref<8x32xbf16, #tpu.memory_space<vmem>>, %arg2: memref<32x4xbf16, #tpu.memory_space<vmem>>, %arg3: memref<1x4xf32, #tpu.memory_space<vmem>>, %arg4: memref<8x4xf32, #tpu.memory_space<vmem>>) attributes {dimension_semantics = [#tpu.dimension_semantics<parallel>], iteration_bounds = array<i64: 2>, scalar_prefetch = 0 : i64, scratch_operands = 0 : i64, tpu.core_type = #tpu.core_type<tc>, window_params = [{transform_indices = @transform_0, window_bounds = array<i64: 8, 32>}, {pipeline_mode = #tpu.pipeline_mode<synchronous>, transform_indices = @transform_1, window_bounds = array<i64: 32, 4>}, {pipeline_mode = #tpu.pipeline_mode<synchronous>, transform_indices = @transform_2, window_bounds = array<i64: 1, 4>}, {transform_indices = @transform_3, window_bounds = array<i64: 8, 4>}]} {
    %c0 = arith.constant 0 : index
    %c0_0 = arith.constant 0 : index
    %0 = vector.load %arg1[%c0, %c0_0] : memref<8x32xbf16, #tpu.memory_space<vmem>>, vector<8x32xbf16>
    %c0_1 = arith.constant 0 : index
    %c0_2 = arith.constant 0 : index
    %1 = vector.load %arg2[%c0_1, %c0_2] : memref<32x4xbf16, #tpu.memory_space<vmem>>, vector<32x4xbf16>
    %cst = arith.constant dense<0.000000e+00> : vector<8x4xf32>
    %2 = tpu.matmul %0, %1, %cst {dimension_numbers = #tpu.dot_dimension_numbers<[1], [0], [0], [1], [0, 0, 1, 1], [], []>} : vector<8x32xbf16>, vector<32x4xbf16>, vector<8x4xf32> -> vector<8x4xf32>
    %c0_3 = arith.constant 0 : index
    %c0_4 = arith.constant 0 : index
    %3 = vector.load %arg3[%c0_3, %c0_4] : memref<1x4xf32, #tpu.memory_space<vmem>>, vector<1x4xf32>
    %4 = vector.broadcast %3 : vector<1x4xf32> to vector<8x4xf32>
    %5 = arith.addf %2, %4 : vector<8x4xf32>
    %cst_5 = arith.constant dense<0xFF800000> : vector<8xf32>
    %6 = vector.multi_reduction <maximumf>, %5, %cst_5 [1] : vector<8x4xf32> to vector<8xf32>
    %7 = vector.shape_cast %6 : vector<8xf32> to vector<8x1xf32>
    %8 = vector.broadcast %7 : vector<8x1xf32> to vector<8x4xf32>
    %9 = arith.subf %5, %8 : vector<8x4xf32>
    %10 = math.exp %9 : vector<8x4xf32>
    %cst_6 = arith.constant dense<0.000000e+00> : vector<8xf32>
    %11 = vector.multi_reduction <add>, %10, %cst_6 [1] : vector<8x4xf32> to vector<8xf32>
    %12 = vector.shape_cast %11 : vector<8xf32> to vector<8x1xf32>
    %13 = tpu.reciprocal %12 {approx = true} : vector<8x1xf32> -> vector<8x1xf32>
    %14 = vector.broadcast %13 : vector<8x1xf32> to vector<8x4xf32>
    %15 = arith.mulf %10, %14 : vector<8x4xf32>
    %c0_7 = arith.constant 0 : index
    %c0_8 = arith.constant 0 : index
    %16 = vector.load %arg4[%c0_7, %c0_8] : memref<8x4xf32, #tpu.memory_space<vmem>>, vector<8x4xf32>
    tpu.vector_store %arg4[%c0_7, %c0_8], %15 {strides = array<i32>} : memref<8x4xf32, #tpu.memory_space<vmem>>, vector<8x4xf32>,
    return
  }
  func.func @transform_0(%arg0: i32) -> (i32, i32) {
    %c0_i32 = arith.constant 0 : i32
    %c0_i32_0 = arith.constant 0 : i32
    return %arg0, %c0_i32 : i32, i32
  }
  func.func @transform_1(%arg0: i32) -> (i32, i32) {
    %c0_i32 = arith.constant 0 : i32
    %c0_i32_0 = arith.constant 0 : i32
    %c0_i32_1 = arith.constant 0 : i32
    return %c0_i32, %c0_i32_0 : i32, i32
  }
  func.func @transform_2(%arg0: i32) -> (i32, i32) {
    %c0_i32 = arith.constant 0 : i32
    %c0_i32_0 = arith.constant 0 : i32
    %c0_i32_1 = arith.constant 0 : i32
    return %c0_i32, %c0_i32_0 : i32, i32
  }
  func.func @transform_3(%arg0: i32) -> (i32, i32) {
    %c0_i32 = arith.constant 0 : i32
    %c0_i32_0 = arith.constant 0 : i32
    return %arg0, %c0_i32 : i32, i32
  }
}

</mosaic_0001>

<llo_original>
// kernel: tpu_custom_call.1
$region0: #{tpu_custom_call.1}
  #allocation0 [shape = 'u32[]', space=smem, size = 0x4, offset = 0x4, fixed_abs, tag = 'smem constant byte address 0x4 - core index']
  #allocation1 [shape = 'u32[144,128]{1,0:T(1,128)}', space=vmem, size = 0x12000, scoped, tag = 'internal scratch']
  %s0 = inlined_call_operand.vmem [shape: bf16[16,32], index: 0, kind: input, shape index: {}]
  %s1 = inlined_call_operand.vmem [shape: bf16[32,4], index: 1, kind: input, shape index: {}]
  %s2 = inlined_call_operand.vmem [shape: f32[1,4], index: 2, kind: input, shape index: {}]
  %s3 = inlined_call_operand.vmem [shape: f32[16,4], index: 3, kind: output, shape index: {}]
  %s4 = sld [smem:[#allocation0]]
  $region45: #{tpu_custom_call.1} parent=0
    _
  %s6 = ssub.s32 1, %s4
  %s7 = scalar_select 0, %s6, %s4
  loop: start=0, step=1, limit=4
  $region2: #{tpu_custom_call.1} parent=0 // loop_pre_header
    _
  $region3: #{tpu_custom_call.1} parent=0 // loop_header
    %s9 = sphi 0, %s13
    %p10 = scmp.ge.s32.totalorder %s9, 4
    %s19 = sphi 0, %s21
    %s22 = sphi 0, %s19
    %s23 = sphi 0, %s22
    %s39 = sphi 0, %s23
    %s43 = sphi 0, %s43
    %s45 = sphi 0, %s43
    %s46 = sphi 0, %s45
    %s60 = sphi 0, %s46
    %s64 = sphi 0, %s64
    %s66 = sphi 0, %s64
    %s67 = sphi 0, %s66
    %s81 = sphi 0, %s67
    %s87 = sphi 0, %s89
    %s90 = sphi 0, %s87
    %s91 = sphi 0, %s90
    %s107 = sphi 0, %s91
  $region4: #{tpu_custom_call.1} parent=0 // loop_header_branch
    %12 = sbr.rel (%p10) target = $region8
  $region5: #{tpu_custom_call.1} parent=0 // loop_body
    %s14 = ssub.s32 %s9, 1
    %s15 = ssub.s32 %s9, 2
    %s16 = sadd.s32 %s9, 1
    %s17 = ssub.s32 %s9, %s16
    %p18 = scmp.eq.s32.totalorder %s17, 0
    %s20 = sadd.s32 %s19, 1
    %s21 = scalar_select %p18, %s19, %s20
    %p24 = pneg %p18
    %p25 = scmp.eq.s32.totalorder %s9, 1
    %p26 = por %p24, %p25
    %p27 = scmp.ne.s32.totalorder %s19, %s22
    %p28 = scmp.eq.s32.totalorder %s9, 0
    %p29 = por %p27, %p28
    %p30 = scmp.ne.s32.totalorder %s19, %s22
    %p31 = scmp.eq.s32.totalorder %s14, 1
    %p32 = por %p30, %p31
    %p33 = scmp.ne.s32.totalorder %s22, %s23
    %p34 = scmp.eq.s32.totalorder %s14, 0
    %p35 = por %p33, %p34
    %p36 = scmp.ne.s32.totalorder %s22, %s23
    %p37 = scmp.eq.s32.totalorder %s15, 1
    %p38 = por %p36, %p37
    %p40 = scmp.ne.s32.totalorder %s23, %s39
    %p41 = scmp.eq.s32.totalorder %s15, 0
    %p42 = por %p40, %p41
    %s44 = sadd.s32 %s43, 1
    %p47 = scmp.eq.s32.totalorder %s9, 1
    %p48 = scmp.ne.s32.totalorder %s43, %s45
    %p49 = scmp.eq.s32.totalorder %s9, 0
    %p50 = por %p48, %p49
    %p51 = scmp.ne.s32.totalorder %s43, %s45
    %p52 = scmp.eq.s32.totalorder %s14, 1
    %p53 = por %p51, %p52
    %p54 = scmp.ne.s32.totalorder %s45, %s46
    %p55 = scmp.eq.s32.totalorder %s14, 0
    %p56 = por %p54, %p55
    %p57 = scmp.ne.s32.totalorder %s45, %s46
    %p58 = scmp.eq.s32.totalorder %s15, 1
    %p59 = por %p57, %p58
    %p61 = scmp.ne.s32.totalorder %s46, %s60
    %p62 = scmp.eq.s32.totalorder %s15, 0
    %p63 = por %p61, %p62
    %s65 = sadd.s32 %s64, 1
    %p68 = scmp.eq.s32.totalorder %s9, 1
    %p69 = scmp.ne.s32.totalorder %s64, %s66
    %p70 = scmp.eq.s32.totalorder %s9, 0
    %p71 = por %p69, %p70
    %p72 = scmp.ne.s32.totalorder %s64, %s66
    %p73 = scmp.eq.s32.totalorder %s14, 1
    %p74 = por %p72, %p73
    %p75 = scmp.ne.s32.totalorder %s66, %s67
    %p76 = scmp.eq.s32.totalorder %s14, 0
    %p77 = por %p75, %p76
    %p78 = scmp.ne.s32.totalorder %s66, %s67
    %p79 = scmp.eq.s32.totalorder %s15, 1
    %p80 = por %p78, %p79
    %p82 = scmp.ne.s32.totalorder %s67, %s81
    %p83 = scmp.eq.s32.totalorder %s15, 0
    %p84 = por %p82, %p83
    %s85 = ssub.s32 %s9, %s16
    %p86 = scmp.eq.s32.totalorder %s85, 0
    %s88 = sadd.s32 %s87, 1
    %s89 = scalar_select %p86, %s87, %s88
    %p92 = pneg %p86
    %p93 = scmp.eq.s32.totalorder %s9, 1
    %p94 = por %p92, %p93
    %p95 = scmp.ne.s32.totalorder %s87, %s90
    %p96 = scmp.eq.s32.totalorder %s9, 0
    %p97 = por %p95, %p96
    %p98 = scmp.ne.s32.totalorder %s87, %s90
    %p99 = scmp.eq.s32.totalorder %s14, 1
    %p100 = por %p98, %p99
    %p101 = scmp.ne.s32.totalorder %s90, %s91
    %p102 = scmp.eq.s32.totalorder %s14, 0
    %p103 = por %p101, %p102
    %p104 = scmp.ne.s32.totalorder %s90, %s91
    %p105 = scmp.eq.s32.totalorder %s15, 1
    %p106 = por %p104, %p105
    %p108 = scmp.ne.s32.totalorder %s91, %s107
    %p109 = scmp.eq.s32.totalorder %s15, 0
    %p110 = por %p108, %p109
    %p111 = scmp.le.s32.totalorder 1, %s9
    %p112 = scmp.lt.s32.totalorder %s9, 3
    %p113 = pnand %p111, %p112
    %p114 = pneg %p113
    // Predicated region
    $region9: #{tpu_custom_call.1} parent=5 // pred_check
      _
    $region10: #{tpu_custom_call.1} parent=5 // pred_check_branch
      %116 = sbr.rel (%p113) target = $region12
    $region11: #{tpu_custom_call.1} parent=5 // pred_region
      %s117 = ssub.s32 %s9, 1
      // Predicated region
      $region13: #{tpu_custom_call.1} parent=11 // pred_check
        %p118 = pneg %p56
      $region14: #{tpu_custom_call.1} parent=11 // pred_check_branch
        %120 = sbr.rel (%p118) target = $region16
      $region15: #{tpu_custom_call.1} parent=11 // pred_region
        _
      $region16: #{tpu_custom_call.1} parent=11 // pred_fallthru
        _
      // Predicated region
      $region17: #{tpu_custom_call.1} parent=11 // pred_check
        %p121 = pneg %p77
      $region18: #{tpu_custom_call.1} parent=11 // pred_check_branch
        %123 = sbr.rel (%p121) target = $region20
      $region19: #{tpu_custom_call.1} parent=11 // pred_region
        _
      $region20: #{tpu_custom_call.1} parent=11 // pred_fallthru
        _
    $region12: #{tpu_custom_call.1} parent=5 // pred_fallthru
      _
    %p124 = scmp.lt.s32.totalorder %s9, 2
    // Predicated region
    $region21: #{tpu_custom_call.1} parent=5 // pred_check
      %p125 = pneg %p124
    $region22: #{tpu_custom_call.1} parent=5 // pred_check_branch
      %127 = sbr.rel (%p125) target = $region24
    $region23: #{tpu_custom_call.1} parent=5 // pred_region
      // Predicated region
      $region25: #{tpu_custom_call.1} parent=23 // pred_check
        %p128 = pneg %p29
      $region26: #{tpu_custom_call.1} parent=23 // pred_check_branch
        %130 = sbr.rel (%p128) target = $region28
      $region27: #{tpu_custom_call.1} parent=23 // pred_region
        %p131 = scmp.lt.s32.totalorder %s9, 1
        %s132 = scalar_select %p131, %s9, 1
        %s133 = smul.addr %s132, 4
        %s134 = scalar_lea.vmem %s0, %s133
      $region28: #{tpu_custom_call.1} parent=23 // pred_fallthru
        _
    $region24: #{tpu_custom_call.1} parent=5 // pred_fallthru
      _
    %p135 = scmp.le.s32.totalorder 1, %s9
    %p136 = scmp.lt.s32.totalorder %s9, 3
    %p137 = pnand %p135, %p136
    %p138 = pneg %p137
    // Predicated region
    $region29: #{tpu_custom_call.1} parent=5 // pred_check
      _
    $region30: #{tpu_custom_call.1} parent=5 // pred_check_branch
      %140 = sbr.rel (%p137) target = $region32
    $region31: #{tpu_custom_call.1} parent=5 // pred_region
      %s141 = ssub.s32 %s9, 1
      %p142 = scmp.lt.s32.totalorder %s14, 1
      %s143 = scalar_select %p142, %s14, 1
      %s144 = smul.addr %s143, 4
      %s145 = scalar_lea.vmem %s0, %s144
      %p146 = pneg %p35
      %p147 = pneg %p32
      %p148 = pneg %p56
      %p149 = pneg %p53
      %p150 = pneg %p77
      %p151 = pneg %p74
      %p152 = pneg %p103
      %p153 = pneg %p100
      %p154 = scmp.lt.s32.totalorder %s14, 1
      %s155 = scalar_select %p154, %s14, 1
      %s156 = smul.addr %s155, 8
      %s157 = scalar_lea.vmem %s3, %s156
      %p158 = scmp.lt.s32.totalorder %s14, 1
      %s159 = scalar_select %p158, %s14, 1
      %s160 = smul.addr %s159, 4
      %s161 = scalar_lea.vmem %s0, %s160
      %p162 = scmp.lt.s32.totalorder %s14, 1
      %s163 = scalar_select %p162, %s14, 1
      %s164 = smul.addr %s163, 8
      %s165 = scalar_lea.vmem %s3, %s164
      %v167 = vld [vmem:[%s161] sm:$0xf]
      %v168 = vld [vmem:[%s1] sm:$0xf]
      %v169 = vld [vmem:[%s1 + $0x4] sm:$0xf]
      %v170 = vld [vmem:[%s1 + $0x8] sm:$0xf]
      %v171 = vld [vmem:[%s1 + $0xc] sm:$0xf]
      %v172 = vld [vmem:[%s2] sm:$0x1]
      %v174 = vlaneseq
      %v175 = vshrl.u32 %v174, 7
      %v176 = vsub.s32 0, %v175
      %v177 = vrot.slane %v172, %v176
      %v183 = vunpack.c.l.b16 %v168
      %v184 = vunpack.c.l.b16 %v169
      %v185 = vunpack.c.l.b16 %v170
      %v186 = vunpack.c.l.b16 %v171
      %v187 = vpack.c.b16 %v184, %v183
      %v188 = vpack.c.b16 %v186, %v185
      %vm191 = vcmask 261120
      %v193 = vsel %vm191, %v167, 0
      %195 = vmatprep.subr.bf16.mxu0 0
      %196 = vmatpush1.bf16.msra.mxu0 0
      %197 = vmatprep.subr.bf16.mxu0 0
      %198 = vmatpush1.bf16.msra.mxu0 0
      %199 = vmatprep.subr.bf16.mxu0 0
      %200 = vmatpush1.bf16.msra.mxu0 0
      %201 = vmatprep.subr.bf16.mxu0 0
      %202 = vmatpush1.bf16.msra.mxu0 0
      %203 = vmatprep.subr.bf16.mxu0 0
      %204 = vmatpush1.bf16.msra.mxu0 0
      %205 = vmatprep.subr.bf16.mxu0 0
      %206 = vmatpush1.bf16.msra.mxu0 0
      %207 = vmatprep.subr.bf16.mxu0 0
      %208 = vmatpush1.bf16.msra.mxu0 %v188
      %209 = vmatprep.subr.bf16.mxu0 0
      %210 = vmatpush1.bf16.msra.mxu0 %v187
      %211 = vmatprep.subr.bf16.mxu0 0
      %212 = vmatpush2.bf16.msra.mxu0 0
      %213 = vmatprep.subr.bf16.mxu0 0
      %214 = vmatpush2.bf16.msra.mxu0 0
      %215 = vmatprep.subr.bf16.mxu0 0
      %216 = vmatpush2.bf16.msra.mxu0 0
      %217 = vmatprep.subr.bf16.mxu0 0
      %218 = vmatpush2.bf16.msra.mxu0 0
      %219 = vmatprep.subr.bf16.mxu0 0
      %220 = vmatpush2.bf16.msra.mxu0 0
      %221 = vmatprep.subr.bf16.mxu0 0
      %222 = vmatpush2.bf16.msra.mxu0 0
      %223 = vmatprep.subr.bf16.mxu0 0
      %224 = vmatpush2.bf16.msra.mxu0 0
      %225 = vmatprep.subr.bf16.mxu0 0
      %226 = vmatpush2.bf16.msra.mxu0 0
      %227 = vmatprep.mubr.bf16.mxu0 0
      %228 = vmatmul.mubr.bf16.gmra.mxu0 %v193
      %v229 = vpop.f32.mrf.mxu0
      %v230 = vadd.f32 %v177, %v229
      %v231 = vpop.f32.mrf.mxu0
      %v232 = vpop.f32.mrf.mxu0
      %v233 = vpop.f32.mrf.mxu0
      %234 = vdwg.mxu0
      %vm235 = vcmask 31744
      %v236 = vsel %vm235, %v230, -inf
      %237 = vmax.xlane.f32.xlu0 %v236
      %v238 = vpop.xlane.xlu0 %237
      %v239 = vsub.f32 %v230, %v238
      %v240 = vmul.f32 %v239, 1.442695
      %v241 = vpow.pop %v240
      %v242 = vsel %vm235, %v241, 0.0
      %243 = vadd.xlane.f32.xlu0 %v242
      %v244 = vpop.xlane.xlu0 %243
      %v245 = vrcp.pop %v244
      %v246 = vmul.f32 %v241, %v245
      %247 = vst.msk [vmem:[%s165] sm:$0xff] %vm235, %v246
      %p248 = scmp.lt.s32.totalorder %s14, 1
      %s249 = scalar_select %p248, %s14, 1
      %s250 = smul.addr %s249, 8
      %s251 = scalar_lea.vmem %s3, %s250
      // Predicated region
      $region33: #{tpu_custom_call.1} parent=31 // pred_check
        %p252 = pneg %p100
      $region34: #{tpu_custom_call.1} parent=31 // pred_check_branch
        %254 = sbr.rel (%p252) target = $region36
      $region35: #{tpu_custom_call.1} parent=31 // pred_region
        _
      $region36: #{tpu_custom_call.1} parent=31 // pred_fallthru
        _
    $region32: #{tpu_custom_call.1} parent=5 // pred_fallthru
      _
    %p255 = scmp.le.s32.totalorder 2, %s9
    // Predicated region
    $region37: #{tpu_custom_call.1} parent=5 // pred_check
      %p256 = pneg %p255
    $region38: #{tpu_custom_call.1} parent=5 // pred_check_branch
      %258 = sbr.rel (%p256) target = $region40
    $region39: #{tpu_custom_call.1} parent=5 // pred_region
      %s259 = ssub.s32 %s9, 2
      // Predicated region
      $region41: #{tpu_custom_call.1} parent=39 // pred_check
        %p260 = pneg %p106
      $region42: #{tpu_custom_call.1} parent=39 // pred_check_branch
        %262 = sbr.rel (%p260) target = $region44
      $region43: #{tpu_custom_call.1} parent=39 // pred_region
        %p263 = scmp.lt.s32.totalorder %s15, 1
        %s264 = scalar_select %p263, %s15, 1
        %s265 = smul.addr %s264, 8
        %s266 = scalar_lea.vmem %s3, %s265
      $region44: #{tpu_custom_call.1} parent=39 // pred_fallthru
        _
    $region40: #{tpu_custom_call.1} parent=5 // pred_fallthru
      _
  $region6: #{tpu_custom_call.1} parent=0 // loop_footer
    %s13 = sadd.s32 1, %s9
  $region7: #{tpu_custom_call.1} parent=0 // loop_footer_branch
    %8 = sbr.rel target = $region3
  $region8: #{tpu_custom_call.1} parent=0 // loop_exit
    _

</llo_original>
